<compile_context>
chip_gen: v5e
topology: v5e:2x2
jax: 0.10.0
libtpu: 0.0.40
codegen_flags: <defaults>
</compile_context>

<pallas_src>
import jax
import jax.numpy as jnp
from jax.experimental import pallas as pl
from jax.experimental.pallas import tpu as pltpu


def _round_up(x, m):
    return (x + m - 1) // m * m


def linear_kernel(x_ref, w_ref, b_ref, o_ref, acc_ref):
    k = pl.program_id(2)

    @pl.when(k == 0)
    def _init():
        # Fold the bias add into the accumulator init (broadcast once per
        # output tile instead of once per K step).
        acc_ref[...] = jnp.broadcast_to(
            b_ref[...].astype(jnp.float32), acc_ref.shape)

    acc_ref[...] += jnp.dot(
        x_ref[...], w_ref[...], preferred_element_type=jnp.float32)

    @pl.when(k == pl.num_programs(2) - 1)
    def _store():
        o_ref[...] = acc_ref[...].astype(o_ref.dtype)


def linear(x, w, b, *, tm=256, tn=512, tk=512,
           compute_dtype=None, out_dtype=None):
    """x: (M, K), w: (K, N), b: (N,) -> (M, N) == x @ w + b."""
    M, K = x.shape
    K2, N = w.shape
    assert K == K2 and b.shape == (N,)
    out_dtype = out_dtype or x.dtype

    # Optionally run the MXU in a narrower dtype (e.g. bf16 on v6e/v7x);
    # accumulation stays in f32 inside the kernel.
    if compute_dtype is not None:
        x = x.astype(compute_dtype)
        w = w.astype(compute_dtype)

    # Clamp tiles to the (aligned) problem size, keeping vreg/MXU alignment:
    # tm multiple of 8, tn/tk multiples of 128.
    tm = min(tm, _round_up(M, 8))
    tn = min(tn, _round_up(N, 128))
    tk = min(tk, _round_up(K, 128))

    Mp, Np, Kp = _round_up(M, tm), _round_up(N, tn), _round_up(K, tk)

    xp = x if (Mp == M and Kp == K) else jnp.pad(x, ((0, Mp - M), (0, Kp - K)))
    wp = w if (Kp == K and Np == N) else jnp.pad(w, ((0, Kp - K), (0, Np - N)))
    bp = (b if Np == N else jnp.pad(b, (0, Np - N))).astype(jnp.float32)
    b2d = bp.reshape(1, Np)  # 2-D, lane-aligned bias tile

    grid = (Mp // tm, Np // tn, Kp // tk)

    in_itemsize = jnp.dtype(xp.dtype).itemsize
    out_itemsize = jnp.dtype(out_dtype).itemsize
    # double-buffered inputs + f32 accumulator + double-buffered output tile
    vmem_need = (2 * (tm * tk + tk * tn + tn) * in_itemsize
                 + tm * tn * 4
                 + 2 * tm * tn * out_itemsize)
    vmem_limit = int(min(max(2 * vmem_need, 32 * 1024 * 1024),
                         48 * 1024 * 1024))

    cost = pl.CostEstimate(
        flops=2 * M * N * K,
        transcendentals=0,
        bytes_accessed=(M * K + K * N) * in_itemsize
                       + N * 4 + M * N * out_itemsize,
    )

    out_p = pl.pallas_call(
        linear_kernel,
        out_shape=jax.ShapeDtypeStruct((Mp, Np), out_dtype),
        grid=grid,
        in_specs=[
            pl.BlockSpec((tm, tk), lambda i, j, k: (i, k)),
            pl.BlockSpec((tk, tn), lambda i, j, k: (k, j)),
            pl.BlockSpec((1, tn), lambda i, j, k: (0, j)),
        ],
        out_specs=pl.BlockSpec((tm, tn), lambda i, j, k: (i, j)),
        scratch_shapes=[pltpu.VMEM((tm, tn), jnp.float32)],
        compiler_params=pltpu.CompilerParams(
            dimension_semantics=("parallel", "parallel", "arbitrary"),
            vmem_limit_bytes=vmem_limit,
        ),
        cost_estimate=cost,
    )(xp, wp, b2d)

    if (Mp, Np) != (M, N):
        out_p = out_p[:M, :N]
    return out_p


if __name__ == "__main__":
    # Deterministic parameters / inputs (synthetic, matching the
    # nn.Parameter(torch.randn(...)) shapes from the module __init__).
    in_features = 32
    out_features = 128
    batch = 8

    key = jax.random.PRNGKey(0)
    kx, kw, kb = jax.random.split(key, 3)
    x = jax.random.normal(kx, (batch, in_features), dtype=jnp.float32)
    w = jax.random.normal(kw, (in_features, out_features), dtype=jnp.float32)
    b = jax.random.normal(kb, (out_features,), dtype=jnp.float32)

    out = linear(x, w, b)
    jax.block_until_ready(out)

    ref = x @ w + b[None, :]
    assert out.shape == (batch, out_features)
    assert jnp.allclose(out, ref, atol=1e-5, rtol=1e-5)

    # Second, non-aligned shape to exercise the padding / multi-tile path.
    k2 = jax.random.PRNGKey(1)
    k2x, k2w, k2b = jax.random.split(k2, 3)
    M2, Kd2, N2 = 70, 200, 300
    x2 = jax.random.normal(k2x, (M2, Kd2), dtype=jnp.float32)
    w2 = jax.random.normal(k2w, (Kd2, N2), dtype=jnp.float32)
    b2 = jax.random.normal(k2b, (N2,), dtype=jnp.float32)
    out2 = linear(x2, w2, b2)
    jax.block_until_ready(out2)
    ref2 = x2 @ w2 + b2[None, :]
    assert out2.shape == (M2, N2)
    assert jnp.allclose(out2, ref2, atol=1e-3, rtol=1e-3)

    print("KERNEL_OK")
</pallas_src>

<mosaic_0001>
module attributes {stable_mosaic.version = 11 : i64} {
  func.func @linear_kernel(%arg0: i32, %arg1: i32, %arg2: i32, %arg3: memref<8x128xf32, #tpu.memory_space<vmem>>, %arg4: memref<128x128xf32, #tpu.memory_space<vmem>>, %arg5: memref<1x128xf32, #tpu.memory_space<vmem>>, %arg6: memref<8x128xf32, #tpu.memory_space<vmem>>, %arg7: memref<8x128xf32, #tpu.memory_space<vmem>>) attributes {dimension_semantics = [#tpu.dimension_semantics<parallel>, #tpu.dimension_semantics<parallel>, #tpu.dimension_semantics<arbitrary>], iteration_bounds = array<i64: 1, 1, 1>, scalar_prefetch = 0 : i64, scratch_operands = 1 : i64, tpu.core_type = #tpu.core_type<tc>, window_params = [{transform_indices = @transform_0, window_bounds = array<i64: 8, 128>}, {transform_indices = @transform_1, window_bounds = array<i64: 128, 128>}, {transform_indices = @transform_2, window_bounds = array<i64: 1, 128>}, {transform_indices = @transform_3, window_bounds = array<i64: 8, 128>}]} {
    %c0_i32 = arith.constant 0 : i32
    %0 = arith.cmpi eq, %arg2, %c0_i32 : i32
    %1 = arith.extui %0 : i1 to i32
    %c0_i32_0 = arith.constant 0 : i32
    %2 = arith.cmpi ne, %1, %c0_i32_0 : i32
    scf.if %2 {
      %c0_10 = arith.constant 0 : index
      %c0_11 = arith.constant 0 : index
      %12 = vector.load %arg5[%c0_10, %c0_11] : memref<1x128xf32, #tpu.memory_space<vmem>>, vector<1x128xf32>
      %13 = vector.shape_cast %12 : vector<1x128xf32> to vector<1x128xf32>
      %14 = vector.broadcast %13 : vector<1x128xf32> to vector<8x128xf32>
      %c0_12 = arith.constant 0 : index
      %c0_13 = arith.constant 0 : index
      %15 = vector.load %arg7[%c0_12, %c0_13] : memref<8x128xf32, #tpu.memory_space<vmem>>, vector<8x128xf32>
      tpu.vector_store %arg7[%c0_12, %c0_13], %14 {strides = array<i32>} : memref<8x128xf32, #tpu.memory_space<vmem>>, vector<8x128xf32>,
    } else {
    }
    %c0 = arith.constant 0 : index
    %c0_1 = arith.constant 0 : index
    %3 = vector.load %arg7[%c0, %c0_1] : memref<8x128xf32, #tpu.memory_space<vmem>>, vector<8x128xf32>
    %c0_2 = arith.constant 0 : index
    %c0_3 = arith.constant 0 : index
    %4 = vector.load %arg3[%c0_2, %c0_3] : memref<8x128xf32, #tpu.memory_space<vmem>>, vector<8x128xf32>
    %c0_4 = arith.constant 0 : index
    %c0_5 = arith.constant 0 : index
    %5 = vector.load %arg4[%c0_4, %c0_5] : memref<128x128xf32, #tpu.memory_space<vmem>>, vector<128x128xf32>
    %cst = arith.constant dense<0.000000e+00> : vector<8x128xf32>
    %6 = tpu.matmul %4, %5, %cst {dimension_numbers = #tpu.dot_dimension_numbers<[1], [0], [0], [1], [0, 0, 1, 1], [], []>} : vector<8x128xf32>, vector<128x128xf32>, vector<8x128xf32> -> vector<8x128xf32>
    %7 = arith.addf %3, %6 : vector<8x128xf32>
    %c0_6 = arith.constant 0 : index
    %c0_7 = arith.constant 0 : index
    %8 = vector.load %arg7[%c0_6, %c0_7] : memref<8x128xf32, #tpu.memory_space<vmem>>, vector<8x128xf32>
    tpu.vector_store %arg7[%c0_6, %c0_7], %7 {strides = array<i32>} : memref<8x128xf32, #tpu.memory_space<vmem>>, vector<8x128xf32>,
    %c0_i32_8 = arith.constant 0 : i32
    %9 = arith.cmpi eq, %arg2, %c0_i32_8 : i32
    %10 = arith.extui %9 : i1 to i32
    %c0_i32_9 = arith.constant 0 : i32
    %11 = arith.cmpi ne, %10, %c0_i32_9 : i32
    scf.if %11 {
      %c0_10 = arith.constant 0 : index
      %c0_11 = arith.constant 0 : index
      %12 = vector.load %arg7[%c0_10, %c0_11] : memref<8x128xf32, #tpu.memory_space<vmem>>, vector<8x128xf32>
      %c0_12 = arith.constant 0 : index
      %c0_13 = arith.constant 0 : index
      %13 = vector.load %arg6[%c0_12, %c0_13] : memref<8x128xf32, #tpu.memory_space<vmem>>, vector<8x128xf32>
      tpu.vector_store %arg6[%c0_12, %c0_13], %12 {strides = array<i32>} : memref<8x128xf32, #tpu.memory_space<vmem>>, vector<8x128xf32>,
    } else {
    }
    return
  }
  func.func @transform_0(%arg0: i32, %arg1: i32, %arg2: i32) -> (i32, i32) {
    %c0_i32 = arith.constant 0 : i32
    return %arg0, %arg2 : i32, i32
  }
  func.func @transform_1(%arg0: i32, %arg1: i32, %arg2: i32) -> (i32, i32) {
    %c0_i32 = arith.constant 0 : i32
    return %arg2, %arg1 : i32, i32
  }
  func.func @transform_2(%arg0: i32, %arg1: i32, %arg2: i32) -> (i32, i32) {
    %c0_i32 = arith.constant 0 : i32
    %c0_i32_0 = arith.constant 0 : i32
    return %c0_i32, %arg1 : i32, i32
  }
  func.func @transform_3(%arg0: i32, %arg1: i32, %arg2: i32) -> (i32, i32) {
    %c0_i32 = arith.constant 0 : i32
    return %arg0, %arg1 : i32, i32
  }
}

</mosaic_0001>

<llo_original>
// kernel: tpu_custom_call.1
$region0: #{tpu_custom_call.1}
  #allocation0 [shape = 'u32[]', space=smem, size = 0x4, offset = 0x4, fixed_abs, tag = 'smem constant byte address 0x4 - core index']
  #allocation1 [shape = 'u32[72,128]{1,0:T(1,128)}', space=vmem, size = 0x9000, scoped, tag = 'internal scratch']
  #allocation2 [shape = 'f32[8,128]{1,0:T(8,128)}', space=vmem, size = 0x1000, scoped, tag = 'scratch operand']
  %s0 = inlined_call_operand.hbm [shape: f32[8,128], index: 0, kind: input, shape index: {}]
  %s1 = inlined_call_operand.hbm [shape: f32[128,128], index: 1, kind: input, shape index: {}]
  %s2 = inlined_call_operand.vmem [shape: f32[1,128], index: 2, kind: input, shape index: {}]
  %s3 = inlined_call_operand.hbm [shape: f32[8,128], index: 3, kind: output, shape index: {}]
  %s4 = sld [smem:[#allocation0]]
  $region38: #{tpu_custom_call.1} parent=0
    _
  %s6 = ssub.s32 1, %s4
  %s7 = scalar_select 0, %s6, %s4
  $region1: #{tpu_custom_call.1} parent=0
    #allocation3 [shape = 'u8[4096]{0}', space=vmem, size = 0x1000, scoped, tag = 'input window, operand 0, single buffered']
    #allocation4 [shape = 's32[1]{0}', space=sflag, size = 0x4, scoped, tag = 'scoped memory for tpu_custom_call.1']
    #allocation5 [shape = 's32[1]{0}', space=sflag, size = 0x4, scoped, tag = 'scoped memory for tpu_custom_call.1']
    #allocation6 [shape = 'u8[65536]{0}', space=vmem, size = 0x10000, scoped, tag = 'input window, operand 1, single buffered']
    #allocation7 [shape = 's32[1]{0}', space=sflag, size = 0x4, scoped, tag = 'scoped memory for tpu_custom_call.1']
    #allocation8 [shape = 'u8[4096]{0}', space=vmem, size = 0x1000, scoped, tag = 'output window, operand 0, single buffered']
    %8 = vsyncpa [#allocation4], 0
    %9 = vsyncpa [#allocation7], 0
    %10 = vsyncpa [#allocation5], 0
    // Predicated region
    $region2: #{tpu_custom_call.1} parent=1 // pred_check
      _
    $region3: #{tpu_custom_call.1} parent=1 // pred_check_branch
      %12 = sbr.rel (0) target = $region5
    $region4: #{tpu_custom_call.1} parent=1 // pred_region
      %14 = vsyncadd [#allocation4], 0
      %s16 = sshll.u32 %s0, 4
      %s17 = int_to_ptr.hbm [resolvable:$true] %s16
      %s18 = sshll.u32 [#allocation3], 4
      %s19 = int_to_ptr.vmem [resolvable:$true] %s18
      %21 = dma.hbm_to_vmem [thread:$0]  %s17, 128, %s19, [#allocation4]
    $region5: #{tpu_custom_call.1} parent=1 // pred_fallthru
      _
    // Predicated region
    $region6: #{tpu_custom_call.1} parent=1 // pred_check
      _
    $region7: #{tpu_custom_call.1} parent=1 // pred_check_branch
      %23 = sbr.rel (0) target = $region9
    $region8: #{tpu_custom_call.1} parent=1 // pred_region
      %25 = vsyncadd [#allocation7], 0
      %s26 = sshll.u32 %s1, 4
      %s27 = int_to_ptr.hbm [resolvable:$true] %s26
      %s28 = sshll.u32 [#allocation6], 4
      %s29 = int_to_ptr.vmem [resolvable:$true] %s28
      %34 = dma.hbm_to_vmem [thread:$0]  %s27, 2048, %s29, [#allocation7], 128, 128, 8
    $region9: #{tpu_custom_call.1} parent=1 // pred_fallthru
      _
    // Predicated region
    $region10: #{tpu_custom_call.1} parent=1 // pred_check
      _
    $region11: #{tpu_custom_call.1} parent=1 // pred_check_branch
      %36 = sbr.rel (0) target = $region13
    $region12: #{tpu_custom_call.1} parent=1 // pred_region
      _
    $region13: #{tpu_custom_call.1} parent=1 // pred_fallthru
      _
    // Predicated region
    $region14: #{tpu_custom_call.1} parent=1 // pred_check
      _
    $region15: #{tpu_custom_call.1} parent=1 // pred_check_branch
      %38 = sbr.rel (0) target = $region17
    $region16: #{tpu_custom_call.1} parent=1 // pred_region
      %40 = dma.done [#allocation4], 128
    $region17: #{tpu_custom_call.1} parent=1 // pred_fallthru
      _
    // Predicated region
    $region18: #{tpu_custom_call.1} parent=1 // pred_check
      _
    $region19: #{tpu_custom_call.1} parent=1 // pred_check_branch
      %42 = sbr.rel (0) target = $region21
    $region20: #{tpu_custom_call.1} parent=1 // pred_region
      %44 = dma.done [#allocation7], 2048
    $region21: #{tpu_custom_call.1} parent=1 // pred_fallthru
      _
    %p45 = scmp.eq.s32.totalorder 0, 0
    // Predicated region
    $region22: #{tpu_custom_call.1} parent=1 // pred_check
      %p46 = pneg %p45
    $region23: #{tpu_custom_call.1} parent=1 // pred_check_branch
      %48 = sbr.rel (%p46) target = $region25
    $region24: #{tpu_custom_call.1} parent=1 // pred_region
      %v49 = vld [vmem:[%s2] sm:$0x1]
      %v51 = vperm.slane %v49, 0
      %53 = vst [vmem:[#allocation2] sm:$0xff] %v51
    $region25: #{tpu_custom_call.1} parent=1 // pred_fallthru
      _
    %v54 = vld [vmem:[#allocation2] sm:$0xff]
    %v55 = vld [vmem:[#allocation3] sm:$0xff]
    %v56 = vld [vmem:[#allocation6] sm:$0xff]
    %v57 = vld [vmem:[#allocation6 + $0x8] sm:$0xff]
    %v58 = vld [vmem:[#allocation6 + $0x10] sm:$0xff]
    %v59 = vld [vmem:[#allocation6 + $0x18] sm:$0xff]
    %v60 = vld [vmem:[#allocation6 + $0x20] sm:$0xff]
    %v61 = vld [vmem:[#allocation6 + $0x28] sm:$0xff]
    %v62 = vld [vmem:[#allocation6 + $0x30] sm:$0xff]
    %v63 = vld [vmem:[#allocation6 + $0x38] sm:$0xff]
    %v64 = vld [vmem:[#allocation6 + $0x40] sm:$0xff]
    %v65 = vld [vmem:[#allocation6 + $0x48] sm:$0xff]
    %v66 = vld [vmem:[#allocation6 + $0x50] sm:$0xff]
    %v67 = vld [vmem:[#allocation6 + $0x58] sm:$0xff]
    %v68 = vld [vmem:[#allocation6 + $0x60] sm:$0xff]
    %v69 = vld [vmem:[#allocation6 + $0x68] sm:$0xff]
    %v70 = vld [vmem:[#allocation6 + $0x70] sm:$0xff]
    %v71 = vld [vmem:[#allocation6 + $0x78] sm:$0xff]
    %72 = vmatpush.msra.mxu0 %v71
    %73 = vmatpush.msra.mxu0 %v70
    %74 = vmatpush.msra.mxu0 %v69
    %75 = vmatpush.msra.mxu0 %v68
    %76 = vmatpush.msra.mxu0 %v67
    %77 = vmatpush.msra.mxu0 %v66
    %78 = vmatpush.msra.mxu0 %v65
    %79 = vmatpush.msra.mxu0 %v64
    %80 = vmatpush.msra.mxu0 %v63
    %81 = vmatpush.msra.mxu0 %v62
    %82 = vmatpush.msra.mxu0 %v61
    %83 = vmatpush.msra.mxu0 %v60
    %84 = vmatpush.msra.mxu0 %v59
    %85 = vmatpush.msra.mxu0 %v58
    %86 = vmatpush.msra.mxu0 %v57
    %87 = vmatpush.msra.mxu0 %v56
    %88 = vmatmul.f32.gmra.mxu0 %v55
    %v89 = vpop.f32.mrf.mxu0
    %v90 = vadd.f32 0.0, %v89
    %91 = vdwg.mxu0
    %v92 = vadd.f32 %v54, %v90
    %93 = vst [vmem:[#allocation2] sm:$0xff] %v92
    // Predicated region
    $region26: #{tpu_custom_call.1} parent=1 // pred_check
      %p94 = pneg %p45
    $region27: #{tpu_custom_call.1} parent=1 // pred_check_branch
      %96 = sbr.rel (%p94) target = $region29
    $region28: #{tpu_custom_call.1} parent=1 // pred_region
      %v97 = vld [vmem:[#allocation2] sm:$0xff]
      %98 = vst [vmem:[#allocation8] sm:$0xff] %v97
    $region29: #{tpu_custom_call.1} parent=1 // pred_fallthru
      _
    // Predicated region
    $region30: #{tpu_custom_call.1} parent=1 // pred_check
      _
    $region31: #{tpu_custom_call.1} parent=1 // pred_check_branch
      %100 = sbr.rel (0) target = $region33
    $region32: #{tpu_custom_call.1} parent=1 // pred_region
      %102 = vsyncadd [#allocation5], 0
      %s104 = sshll.u32 [#allocation8], 4
      %s105 = int_to_ptr.vmem [resolvable:$true] %s104
      %s106 = sshll.u32 %s3, 4
      %s107 = int_to_ptr.hbm [resolvable:$true] %s106
      %109 = dma.vmem_to_hbm [thread:$0]  %s105, 128, %s107, [#allocation5]
    $region33: #{tpu_custom_call.1} parent=1 // pred_fallthru
      _
    // Predicated region
    $region34: #{tpu_custom_call.1} parent=1 // pred_check
      _
    $region35: #{tpu_custom_call.1} parent=1 // pred_check_branch
      %111 = sbr.rel (0) target = $region37
    $region36: #{tpu_custom_call.1} parent=1 // pred_region
      %113 = dma.done [#allocation5], 128
    $region37: #{tpu_custom_call.1} parent=1 // pred_fallthru
      _
    %114 = vsyncpa [#allocation4], 1
    %115 = vsyncpa [#allocation7], 1
    %116 = vsyncpa [#allocation5], 1

</llo_original>
